<compile_context>
chip_gen: v5e
topology: v5e:2x2
jax: 0.10.0
libtpu: 0.0.40
codegen_flags: <defaults>
</compile_context>

<pallas_src>
import functools

import jax
import jax.numpy as jnp
from jax.experimental import pallas as pl
from jax.experimental.pallas import tpu as pltpu


def _round_up(v, m):
    return (v + m - 1) // m * m


def _nconv2d_mm_kernel(p_ref, w_ref, b_ref, o_ref, acc_ref):
    """One (tm, tn) output tile; grid axis 2 runs over K tiles (reduction)."""
    k = pl.program_id(2)

    @pl.when(k == 0)
    def _():
        acc_ref[...] = jnp.zeros_like(acc_ref)

    # bf16 x bf16 -> f32 accumulation on the MXU.
    acc_ref[...] += jnp.dot(p_ref[...], w_ref[...], preferred_element_type=jnp.float32)

    @pl.when(k == pl.num_programs(2) - 1)
    def _():
        # Scale is already folded into the weights; bias is added un-scaled (as in the
        # PyTorch module, where bias is added after the scale multiply).
        o_ref[...] = (acc_ref[...] + b_ref[...]).astype(o_ref.dtype)


def _pad2d_to(a, rows, cols):
    return jnp.pad(a, ((0, rows - a.shape[0]), (0, cols - a.shape[1])))


def _pick_tile(dim_pad, candidates=(512, 256, 128)):
    for c in candidates:
        if dim_pad % c == 0:
            return c
    return dim_pad  # dim_pad < 128 only happens if we chose not to pad (never here)


@functools.partial(jax.jit, static_argnames=("stride", "padding", "dilation", "groups"))
def nconv2d_forward(x, weight, noise, bias, scale,
                    *, stride=(1, 1), padding=(0, 0), dilation=(1, 1), groups=1):
    """Pallas implementation of NConv2d.forward(x).

    x:      (B, Cin, H, W)        NCHW (PyTorch layout)
    weight: (Cout, Cin, kh, kw)
    noise:  (Cout, Cin, kh, kw)
    bias:   (Cout,) or None
    scale:  python/JAX scalar
    """
    if groups != 1:
        # TODO(synk): grouped convolution not implemented in the Pallas path.
        raise NotImplementedError("groups != 1 not supported")

    sh, sw = stride
    ph, pw = padding
    dh, dw = dilation

    B, Cin, H, W = x.shape
    Cout, _, kh, kw = weight.shape
    OH = (H + 2 * ph - dh * (kh - 1) - 1) // sh + 1
    OW = (W + 2 * pw - dw * (kw - 1) - 1) // sw + 1

    # ---- pre-fold effective weight in f32, then cast to bf16 (no double rounding) ----
    scale_f32 = jnp.asarray(scale, dtype=jnp.float32)
    w_eff = (weight.astype(jnp.float32) + noise.astype(jnp.float32)) * scale_f32
    w2d = jnp.transpose(w_eff, (2, 3, 1, 0)).reshape(kh * kw * Cin, Cout)  # (K, N) f32
    if bias is None:
        bias = jnp.zeros((Cout,), dtype=jnp.float32)
    b2d = bias.reshape(1, Cout).astype(jnp.float32)

    # ---- wrapper glue: NCHW -> NHWC (bf16), zero-pad, im2col patches (layout only) ----
    x_nhwc = jnp.transpose(x, (0, 2, 3, 1)).astype(jnp.bfloat16)
    x_pad = jnp.pad(x_nhwc, ((0, 0), (ph, ph), (pw, pw), (0, 0)))
    cols = []
    for ky in range(kh):
        for kx in range(kw):
            y0 = ky * dh
            x0 = kx * dw
            sl = x_pad[:, y0: y0 + (OH - 1) * sh + 1: sh,
                       x0: x0 + (OW - 1) * sw + 1: sw, :]          # (B, OH, OW, Cin)
            cols.append(sl)
    # feature order: (ky, kx, cin)  ->  matches weight.transpose(2,3,1,0) above
    patches = jnp.concatenate(cols, axis=-1).reshape(B * OH * OW, kh * kw * Cin)

    M, K = patches.shape
    N = Cout

    # ---- pad to MXU/lane-friendly sizes; pick tiles ----
    # tm: big tiles to amortize per-step overhead, but always keep >=2 i-tiles for
    # v7x megacore sharding when M is large enough. Multiple of 16 so bf16/f32 output
    # tiling constraints are both satisfied for tiny M.
    if M >= 1024:
        tm = 512
    elif M >= 512:
        tm = 256
    elif M >= 256:
        tm = 128
    else:
        tm = _round_up(M, 16)
    M_pad = _round_up(M, tm)

    K_pad = _round_up(K, 128)
    N_pad = _round_up(N, 128)
    # Single j-tile (patches read from HBM exactly once) when N_pad fits a tile;
    # single k-tile when K_pad fits. Otherwise fall back to 512/256/128 divisors
    # (>=256 preferred for the v6e/v7x 2x256^2 MXU).
    tn = N_pad if N_pad <= 512 else _pick_tile(N_pad)
    tk = K_pad if K_pad <= 512 else _pick_tile(K_pad)

    patches_p = _pad2d_to(patches, M_pad, K_pad)                      # bf16
    w_p = _pad2d_to(w2d, K_pad, N_pad).astype(jnp.bfloat16)           # bf16
    b_p = _pad2d_to(b2d, 1, N_pad)                                    # f32

    grid = (M_pad // tm, N_pad // tn, K_pad // tk)

    grid_spec = pltpu.PrefetchScalarGridSpec(
        num_scalar_prefetch=0,
        grid=grid,
        in_specs=[
            pl.BlockSpec((tm, tk), lambda i, j, k: (i, k)),   # patches (bf16)
            pl.BlockSpec((tk, tn), lambda i, j, k: (k, j)),   # effective weight (bf16)
            pl.BlockSpec((1, tn), lambda i, j, k: (0, j)),    # bias (f32, lane-dense)
        ],
        out_specs=pl.BlockSpec((tm, tn), lambda i, j, k: (i, j)),
        scratch_shapes=[pltpu.VMEM((tm, tn), jnp.float32)],
    )

    out_padded = pl.pallas_call(
        _nconv2d_mm_kernel,
        out_shape=jax.ShapeDtypeStruct((M_pad, N_pad), x.dtype),
        grid_spec=grid_spec,
        compiler_params=pltpu.CompilerParams(
            # Two parallel axes -> megacore sharding on v7x; K axis is the reduction.
            dimension_semantics=("parallel", "parallel", "arbitrary"),
        ),
    )(patches_p, w_p, b_p)

    # ---- un-pad and restore NCHW layout ----
    out = out_padded[:M, :N].reshape(B, OH, OW, Cout)
    return jnp.transpose(out, (0, 3, 1, 2))


if __name__ == "__main__":
    # NConv2d(in_channels=4, out_channels=8, kernel_size=3, stride=1, padding=1, bias=True)
    B, Cin, H, W = 2, 4, 16, 16
    Cout, kh, kw = 8, 3, 3
    stride, padding, dilation = (1, 1), (1, 1), (1, 1)

    key = jax.random.PRNGKey(0)
    kx, kwgt, kb, kn = jax.random.split(key, 4)

    fan_in = Cin * kh * kw
    bound = 1.0 / jnp.sqrt(jnp.float32(fan_in))
    weight = jax.random.uniform(kwgt, (Cout, Cin, kh, kw), jnp.float32, -bound, bound)
    bias = jax.random.uniform(kb, (Cout,), jnp.float32, -bound, bound)
    # NConv2d initializes noise to zeros / scale to 1.0; use nonzero values here to
    # exercise the full forward path (weight+noise add, scale mul, bias add).
    noise = 0.01 * jax.random.normal(kn, (Cout, Cin, kh, kw), jnp.float32)
    scale = 0.5

    x = jax.random.normal(kx, (B, Cin, H, W), jnp.float32)

    y = nconv2d_forward(x, weight, noise, bias, scale,
                        stride=stride, padding=padding, dilation=dilation, groups=1)
    jax.block_until_ready(y)

    # Pure-JAX f32 reference for sanity (kernel uses bf16 MXU operands with f32
    # accumulation, so tolerance is slightly looser than a pure-f32 path).
    y_ref = jax.lax.conv_general_dilated(
        x, weight + noise, window_strides=stride,
        padding=(padding, padding), rhs_dilation=dilation,
        dimension_numbers=("NCHW", "OIHW", "NCHW"),
    ) * scale + bias.reshape(1, -1, 1, 1)

    assert y.shape == y_ref.shape, (y.shape, y_ref.shape)
    err = float(jnp.max(jnp.abs(y - y_ref)))
    assert jnp.allclose(y, y_ref, atol=3e-2, rtol=3e-2), err

    print("KERNEL_OK")
</pallas_src>

<mosaic_0001>
module attributes {stable_mosaic.version = 11 : i64} {
  func.func @_nconv2d_mm_kernel(%arg0: i32, %arg1: i32, %arg2: i32, %arg3: memref<256x128xbf16, #tpu.memory_space<vmem>>, %arg4: memref<128x128xbf16, #tpu.memory_space<vmem>>, %arg5: memref<1x128xf32, #tpu.memory_space<vmem>>, %arg6: memref<256x128xf32, #tpu.memory_space<vmem>>, %arg7: memref<256x128xf32, #tpu.memory_space<vmem>>) attributes {dimension_semantics = [#tpu.dimension_semantics<parallel>, #tpu.dimension_semantics<parallel>, #tpu.dimension_semantics<arbitrary>], iteration_bounds = array<i64: 2, 1, 1>, scalar_prefetch = 0 : i64, scratch_operands = 1 : i64, tpu.core_type = #tpu.core_type<tc>, window_params = [{transform_indices = @transform_0, window_bounds = array<i64: 256, 128>}, {transform_indices = @transform_1, window_bounds = array<i64: 128, 128>}, {transform_indices = @transform_2, window_bounds = array<i64: 1, 128>}, {transform_indices = @transform_3, window_bounds = array<i64: 256, 128>}]} {
    %c0_i32 = arith.constant 0 : i32
    %0 = arith.cmpi eq, %arg2, %c0_i32 : i32
    %1 = arith.extui %0 : i1 to i32
    %c0_i32_0 = arith.constant 0 : i32
    %2 = arith.cmpi ne, %1, %c0_i32_0 : i32
    scf.if %2 {
      %cst_10 = arith.constant 0.000000e+00 : f32
      %12 = vector.broadcast %cst_10 : f32 to vector<256x128xf32>
      %c0_11 = arith.constant 0 : index
      %c0_12 = arith.constant 0 : index
      %13 = vector.load %arg7[%c0_11, %c0_12] : memref<256x128xf32, #tpu.memory_space<vmem>>, vector<256x128xf32>
      tpu.vector_store %arg7[%c0_11, %c0_12], %12 {strides = array<i32>} : memref<256x128xf32, #tpu.memory_space<vmem>>, vector<256x128xf32>,
    } else {
    }
    %c0 = arith.constant 0 : index
    %c0_1 = arith.constant 0 : index
    %3 = vector.load %arg7[%c0, %c0_1] : memref<256x128xf32, #tpu.memory_space<vmem>>, vector<256x128xf32>
    %c0_2 = arith.constant 0 : index
    %c0_3 = arith.constant 0 : index
    %4 = vector.load %arg3[%c0_2, %c0_3] : memref<256x128xbf16, #tpu.memory_space<vmem>>, vector<256x128xbf16>
    %c0_4 = arith.constant 0 : index
    %c0_5 = arith.constant 0 : index
    %5 = vector.load %arg4[%c0_4, %c0_5] : memref<128x128xbf16, #tpu.memory_space<vmem>>, vector<128x128xbf16>
    %cst = arith.constant dense<0.000000e+00> : vector<256x128xf32>
    %6 = tpu.matmul %4, %5, %cst {dimension_numbers = #tpu.dot_dimension_numbers<[1], [0], [0], [1], [0, 0, 1, 1], [], []>} : vector<256x128xbf16>, vector<128x128xbf16>, vector<256x128xf32> -> vector<256x128xf32>
    %7 = arith.addf %3, %6 : vector<256x128xf32>
    %c0_6 = arith.constant 0 : index
    %c0_7 = arith.constant 0 : index
    %8 = vector.load %arg7[%c0_6, %c0_7] : memref<256x128xf32, #tpu.memory_space<vmem>>, vector<256x128xf32>
    tpu.vector_store %arg7[%c0_6, %c0_7], %7 {strides = array<i32>} : memref<256x128xf32, #tpu.memory_space<vmem>>, vector<256x128xf32>,
    %c0_i32_8 = arith.constant 0 : i32
    %9 = arith.cmpi eq, %arg2, %c0_i32_8 : i32
    %10 = arith.extui %9 : i1 to i32
    %c0_i32_9 = arith.constant 0 : i32
    %11 = arith.cmpi ne, %10, %c0_i32_9 : i32
    scf.if %11 {
      %c0_10 = arith.constant 0 : index
      %c0_11 = arith.constant 0 : index
      %12 = vector.load %arg7[%c0_10, %c0_11] : memref<256x128xf32, #tpu.memory_space<vmem>>, vector<256x128xf32>
      %c0_12 = arith.constant 0 : index
      %c0_13 = arith.constant 0 : index
      %13 = vector.load %arg5[%c0_12, %c0_13] : memref<1x128xf32, #tpu.memory_space<vmem>>, vector<1x128xf32>
      %14 = vector.broadcast %13 : vector<1x128xf32> to vector<256x128xf32>
      %15 = arith.addf %12, %14 : vector<256x128xf32>
      %c0_14 = arith.constant 0 : index
      %c0_15 = arith.constant 0 : index
      %16 = vector.load %arg6[%c0_14, %c0_15] : memref<256x128xf32, #tpu.memory_space<vmem>>, vector<256x128xf32>
      tpu.vector_store %arg6[%c0_14, %c0_15], %15 {strides = array<i32>} : memref<256x128xf32, #tpu.memory_space<vmem>>, vector<256x128xf32>,
    } else {
    }
    return
  }
  func.func @transform_0(%arg0: i32, %arg1: i32, %arg2: i32) -> (i32, i32) {
    %c0_i32 = arith.constant 0 : i32
    return %arg0, %arg2 : i32, i32
  }
  func.func @transform_1(%arg0: i32, %arg1: i32, %arg2: i32) -> (i32, i32) {
    %c0_i32 = arith.constant 0 : i32
    return %arg2, %arg1 : i32, i32
  }
  func.func @transform_2(%arg0: i32, %arg1: i32, %arg2: i32) -> (i32, i32) {
    %c0_i32 = arith.constant 0 : i32
    %c0_i32_0 = arith.constant 0 : i32
    return %c0_i32, %arg1 : i32, i32
  }
  func.func @transform_3(%arg0: i32, %arg1: i32, %arg2: i32) -> (i32, i32) {
    %c0_i32 = arith.constant 0 : i32
    return %arg0, %arg1 : i32, i32
  }
}

</mosaic_0001>

<llo_original>
// kernel: nconv2d_forward.1
$region0: #{nconv2d_forward.1}
  #allocation0 [shape = 'u32[]', space=smem, size = 0x4, offset = 0x4, fixed_abs, tag = 'smem constant byte address 0x4 - core index']
  #allocation1 [shape = 'u32[72,128]{1,0:T(1,128)}', space=vmem, size = 0x9000, scoped, tag = 'internal scratch']
  #allocation2 [shape = 'f32[256,128]{1,0:T(8,128)}', space=vmem, size = 0x20000, scoped, tag = 'scratch operand']
  %s0 = inlined_call_operand.vmem [shape: bf16[512,128], index: 0, kind: input, shape index: {}]
  %s1 = inlined_call_operand.vmem [shape: bf16[128,128], index: 1, kind: input, shape index: {}]
  %s2 = inlined_call_operand.vmem [shape: f32[1,128], index: 2, kind: input, shape index: {}]
  %s3 = inlined_call_operand.vmem [shape: f32[512,128], index: 3, kind: output, shape index: {}]
  %s4 = sld [smem:[#allocation0]]
  $region53: #{nconv2d_forward.1} parent=0
    _
  %s6 = ssub.s32 1, %s4
  %s7 = scalar_select 0, %s6, %s4
  loop: start=0, step=1, limit=4
  $region2: #{nconv2d_forward.1} parent=0 // loop_pre_header
    _
  $region3: #{nconv2d_forward.1} parent=0 // loop_header
    %s9 = sphi 0, %s13
    %p10 = scmp.ge.s32.totalorder %s9, 4
    %s16 = sphi 0, %s35
    %s17 = sphi 0, %s31
    %s18 = sphi 0, %s27
    %s19 = sphi 0, %s16
    %s20 = sphi 0, %s17
    %s21 = sphi 0, %s18
    %s22 = sphi 0, %s19
    %s23 = sphi 0, %s20
    %s24 = sphi 0, %s21
    %s40 = sphi 0, %s42
    %s43 = sphi 0, %s40
    %s44 = sphi 0, %s43
    %s60 = sphi 0, %s44
    %s68 = sphi 0, %s70
    %s71 = sphi 0, %s68
    %s72 = sphi 0, %s71
    %s88 = sphi 0, %s72
    %s94 = sphi 0, %s96
    %s97 = sphi 0, %s94
    %s98 = sphi 0, %s97
    %s114 = sphi 0, %s98
    %s122 = sphi 0, %s124
    %s125 = sphi 0, %s122
    %s126 = sphi 0, %s125
    %s142 = sphi 0, %s126
  $region4: #{nconv2d_forward.1} parent=0 // loop_header_branch
    %12 = sbr.rel (%p10) target = $region8
  $region5: #{nconv2d_forward.1} parent=0 // loop_body
    %s14 = ssub.s32 %s9, 1
    %s15 = ssub.s32 %s9, 2
    %s25 = sadd.s32 1, %s18
    %p26 = scmp.ge.s32.totalorder %s25, 1
    %s27 = scalar_select %p26, 0, %s25
    %s28 = sadd.s32 1, %s17
    %s29 = scalar_select %p26, %s28, %s17
    %p30 = scmp.ge.s32.totalorder %s29, 1
    %s31 = scalar_select %p30, 0, %s29
    %s32 = sadd.s32 1, %s16
    %s33 = scalar_select %p30, %s32, %s16
    %p34 = scmp.ge.s32.totalorder %s33, 2
    %s35 = scalar_select %p34, 0, %s33
    %s36 = ssub.s32 %s16, %s35
    %s37 = ssub.s32 %s18, %s27
    %s38 = sor.u32 %s36, %s37
    %p39 = scmp.eq.s32.totalorder %s38, 0
    %s41 = sadd.s32 %s40, 1
    %s42 = scalar_select %p39, %s40, %s41
    %p45 = pneg %p39
    %p46 = scmp.eq.s32.totalorder %s9, 1
    %p47 = por %p45, %p46
    %p48 = scmp.ne.s32.totalorder %s40, %s43
    %p49 = scmp.eq.s32.totalorder %s9, 0
    %p50 = por %p48, %p49
    %p51 = scmp.ne.s32.totalorder %s40, %s43
    %p52 = scmp.eq.s32.totalorder %s14, 1
    %p53 = por %p51, %p52
    %p54 = scmp.ne.s32.totalorder %s43, %s44
    %p55 = scmp.eq.s32.totalorder %s14, 0
    %p56 = por %p54, %p55
    %p57 = scmp.ne.s32.totalorder %s43, %s44
    %p58 = scmp.eq.s32.totalorder %s15, 1
    %p59 = por %p57, %p58
    %p61 = scmp.ne.s32.totalorder %s44, %s60
    %p62 = scmp.eq.s32.totalorder %s15, 0
    %p63 = por %p61, %p62
    %s64 = ssub.s32 %s18, %s27
    %s65 = ssub.s32 %s17, %s31
    %s66 = sor.u32 %s64, %s65
    %p67 = scmp.eq.s32.totalorder %s66, 0
    %s69 = sadd.s32 %s68, 1
    %s70 = scalar_select %p67, %s68, %s69
    %p73 = pneg %p67
    %p74 = scmp.eq.s32.totalorder %s9, 1
    %p75 = por %p73, %p74
    %p76 = scmp.ne.s32.totalorder %s68, %s71
    %p77 = scmp.eq.s32.totalorder %s9, 0
    %p78 = por %p76, %p77
    %p79 = scmp.ne.s32.totalorder %s68, %s71
    %p80 = scmp.eq.s32.totalorder %s14, 1
    %p81 = por %p79, %p80
    %p82 = scmp.ne.s32.totalorder %s71, %s72
    %p83 = scmp.eq.s32.totalorder %s14, 0
    %p84 = por %p82, %p83
    %p85 = scmp.ne.s32.totalorder %s71, %s72
    %p86 = scmp.eq.s32.totalorder %s15, 1
    %p87 = por %p85, %p86
    %p89 = scmp.ne.s32.totalorder %s72, %s88
    %p90 = scmp.eq.s32.totalorder %s15, 0
    %p91 = por %p89, %p90
    %s92 = ssub.s32 %s17, %s31
    %p93 = scmp.eq.s32.totalorder %s92, 0
    %s95 = sadd.s32 %s94, 1
    %s96 = scalar_select %p93, %s94, %s95
    %p99 = pneg %p93
    %p100 = scmp.eq.s32.totalorder %s9, 1
    %p101 = por %p99, %p100
    %p102 = scmp.ne.s32.totalorder %s94, %s97
    %p103 = scmp.eq.s32.totalorder %s9, 0
    %p104 = por %p102, %p103
    %p105 = scmp.ne.s32.totalorder %s94, %s97
    %p106 = scmp.eq.s32.totalorder %s14, 1
    %p107 = por %p105, %p106
    %p108 = scmp.ne.s32.totalorder %s97, %s98
    %p109 = scmp.eq.s32.totalorder %s14, 0
    %p110 = por %p108, %p109
    %p111 = scmp.ne.s32.totalorder %s97, %s98
    %p112 = scmp.eq.s32.totalorder %s15, 1
    %p113 = por %p111, %p112
    %p115 = scmp.ne.s32.totalorder %s98, %s114
    %p116 = scmp.eq.s32.totalorder %s15, 0
    %p117 = por %p115, %p116
    %s118 = ssub.s32 %s16, %s35
    %s119 = ssub.s32 %s17, %s31
    %s120 = sor.u32 %s118, %s119
    %p121 = scmp.eq.s32.totalorder %s120, 0
    %s123 = sadd.s32 %s122, 1
    %s124 = scalar_select %p121, %s122, %s123
    %p127 = pneg %p121
    %p128 = scmp.eq.s32.totalorder %s9, 1
    %p129 = por %p127, %p128
    %p130 = scmp.ne.s32.totalorder %s122, %s125
    %p131 = scmp.eq.s32.totalorder %s9, 0
    %p132 = por %p130, %p131
    %p133 = scmp.ne.s32.totalorder %s122, %s125
    %p134 = scmp.eq.s32.totalorder %s14, 1
    %p135 = por %p133, %p134
    %p136 = scmp.ne.s32.totalorder %s125, %s126
    %p137 = scmp.eq.s32.totalorder %s14, 0
    %p138 = por %p136, %p137
    %p139 = scmp.ne.s32.totalorder %s125, %s126
    %p140 = scmp.eq.s32.totalorder %s15, 1
    %p141 = por %p139, %p140
    %p143 = scmp.ne.s32.totalorder %s126, %s142
    %p144 = scmp.eq.s32.totalorder %s15, 0
    %p145 = por %p143, %p144
    %p146 = scmp.le.s32.totalorder 1, %s9
    %p147 = scmp.lt.s32.totalorder %s9, 3
    %p148 = pnand %p146, %p147
    %p149 = pneg %p148
    // Predicated region
    $region9: #{nconv2d_forward.1} parent=5 // pred_check
      _
    $region10: #{nconv2d_forward.1} parent=5 // pred_check_branch
      %151 = sbr.rel (%p148) target = $region12
    $region11: #{nconv2d_forward.1} parent=5 // pred_region
      %s152 = ssub.s32 %s9, 1
      // Predicated region
      $region13: #{nconv2d_forward.1} parent=11 // pred_check
        %p153 = pneg %p84
      $region14: #{nconv2d_forward.1} parent=11 // pred_check_branch
        %155 = sbr.rel (%p153) target = $region16
      $region15: #{nconv2d_forward.1} parent=11 // pred_region
        %s156 = smul.u32 16, %s21
        %p157 = scmp.lt.s32.totalorder %s156, 15
        %s158 = scalar_select %p157, %s156, 15
        %p159 = scmp.lt.s32.totalorder %s20, 0
        %s160 = scalar_select %p159, %s20, 0
        %s161 = sadd.s32 %s160, %s158
        %s162 = smul.addr %s161, 4
        %s163 = scalar_lea.vmem %s1, %s162
        %s164 = smul.u32 16, %s21
      $region16: #{nconv2d_forward.1} parent=11 // pred_fallthru
        _
      // Predicated region
      $region17: #{nconv2d_forward.1} parent=11 // pred_check
        %p165 = pneg %p110
      $region18: #{nconv2d_forward.1} parent=11 // pred_check_branch
        %167 = sbr.rel (%p165) target = $region20
      $region19: #{nconv2d_forward.1} parent=11 // pred_region
        %p168 = scmp.lt.s32.totalorder %s20, 0
        %s169 = scalar_select %p168, %s20, 0
        %s170 = scalar_lea.vmem %s2, %s169
      $region20: #{nconv2d_forward.1} parent=11 // pred_fallthru
        _
    $region12: #{nconv2d_forward.1} parent=5 // pred_fallthru
      _
    %p171 = scmp.lt.s32.totalorder %s9, 2
    // Predicated region
    $region21: #{nconv2d_forward.1} parent=5 // pred_check
      %p172 = pneg %p171
    $region22: #{nconv2d_forward.1} parent=5 // pred_check_branch
      %174 = sbr.rel (%p172) target = $region24
    $region23: #{nconv2d_forward.1} parent=5 // pred_region
      // Predicated region
      $region25: #{nconv2d_forward.1} parent=23 // pred_check
        %p175 = pneg %p50
      $region26: #{nconv2d_forward.1} parent=23 // pred_check_branch
        %177 = sbr.rel (%p175) target = $region28
      $region27: #{nconv2d_forward.1} parent=23 // pred_region
        %s178 = smul.u32 32, %s16
        %p179 = scmp.lt.s32.totalorder %s178, 63
        %s180 = scalar_select %p179, %s178, 63
        %p181 = scmp.lt.s32.totalorder %s18, 0
        %s182 = scalar_select %p181, %s18, 0
        %s183 = sadd.s32 %s182, %s180
        %s184 = smul.addr %s183, 4
        %s185 = scalar_lea.vmem %s0, %s184
        %s186 = smul.u32 32, %s16
      $region28: #{nconv2d_forward.1} parent=23 // pred_fallthru
        _
    $region24: #{nconv2d_forward.1} parent=5 // pred_fallthru
      _
    %p187 = scmp.le.s32.totalorder 1, %s9
    %p188 = scmp.lt.s32.totalorder %s9, 3
    %p189 = pnand %p187, %p188
    %p190 = pneg %p189
    // Predicated region
    $region29: #{nconv2d_forward.1} parent=5 // pred_check
      _
    $region30: #{nconv2d_forward.1} parent=5 // pred_check_branch
      %192 = sbr.rel (%p189) target = $region32
    $region31: #{nconv2d_forward.1} parent=5 // pred_region
      %s193 = ssub.s32 %s9, 1
      %s194 = smul.u32 32, %s19
      %p195 = scmp.lt.s32.totalorder %s194, 63
      %s196 = scalar_select %p195, %s194, 63
      %p197 = scmp.lt.s32.totalorder %s21, 0
      %s198 = scalar_select %p197, %s21, 0
      %s199 = sadd.s32 %s198, %s196
      %s200 = smul.addr %s199, 4
      %s201 = scalar_lea.vmem %s0, %s200
      %p202 = pneg %p56
      %p203 = pneg %p53
      %s204 = smul.u32 16, %s21
      %p205 = scmp.lt.s32.totalorder %s204, 15
      %s206 = scalar_select %p205, %s204, 15
      %p207 = scmp.lt.s32.totalorder %s20, 0
      %s208 = scalar_select %p207, %s20, 0
      %s209 = sadd.s32 %s208, %s206
      %s210 = smul.addr %s209, 4
      %s211 = scalar_lea.vmem %s1, %s210
      %p212 = pneg %p84
      %p213 = pneg %p81
      %p214 = scmp.lt.s32.totalorder %s20, 0
      %s215 = scalar_select %p214, %s20, 0
      %s216 = scalar_lea.vmem %s2, %s215
      %p217 = pneg %p110
      %p218 = pneg %p107
      %p219 = pneg %p138
      %p220 = pneg %p135
      %s221 = smul.u32 32, %s19
      %p222 = scmp.lt.s32.totalorder %s221, 63
      %s223 = scalar_select %p222, %s221, 63
      %p224 = scmp.lt.s32.totalorder %s20, 0
      %s225 = scalar_select %p224, %s20, 0
      %s226 = sadd.s32 %s225, %s223
      %s227 = smul.addr %s226, 8
      %s228 = scalar_lea.vmem %s3, %s227
      %s229 = smul.u32 32, %s19
      %p230 = scmp.lt.s32.totalorder %s229, 63
      %s231 = scalar_select %p230, %s229, 63
      %p232 = scmp.lt.s32.totalorder %s21, 0
      %s233 = scalar_select %p232, %s21, 0
      %s234 = sadd.s32 %s233, %s231
      %s235 = smul.addr %s234, 4
      %s236 = scalar_lea.vmem %s0, %s235
      %s237 = smul.u32 32, %s19
      %s238 = smul.u32 16, %s21
      %p239 = scmp.lt.s32.totalorder %s238, 15
      %s240 = scalar_select %p239, %s238, 15
      %p241 = scmp.lt.s32.totalorder %s20, 0
      %s242 = scalar_select %p241, %s20, 0
      %s243 = sadd.s32 %s242, %s240
      %s244 = smul.addr %s243, 4
      %s245 = scalar_lea.vmem %s1, %s244
      %s246 = smul.u32 16, %s21
      %p247 = scmp.lt.s32.totalorder %s20, 0
      %s248 = scalar_select %p247, %s20, 0
      %s249 = scalar_lea.vmem %s2, %s248
      %s250 = smul.u32 32, %s19
      %p251 = scmp.lt.s32.totalorder %s250, 63
      %s252 = scalar_select %p251, %s250, 63
      %p253 = scmp.lt.s32.totalorder %s20, 0
      %s254 = scalar_select %p253, %s20, 0
      %s255 = sadd.s32 %s254, %s252
      %s256 = smul.addr %s255, 8
      %s257 = scalar_lea.vmem %s3, %s256
      %s258 = smul.u32 32, %s19
      %p259 = scmp.eq.s32.totalorder %s21, 0
      // Predicated region
      $region33: #{nconv2d_forward.1} parent=31 // pred_check
        %p260 = pneg %p259
      $region34: #{nconv2d_forward.1} parent=31 // pred_check_branch
        %262 = sbr.rel (%p260) target = $region36
      $region35: #{nconv2d_forward.1} parent=31 // pred_region
        %263 = vst [vmem:[#allocation2] sm:$0xff] 0.0
        %264 = vst [vmem:[#allocation2 + $0x8] sm:$0xff] 0.0
        %265 = vst [vmem:[#allocation2 + $0x10] sm:$0xff] 0.0
        %266 = vst [vmem:[#allocation2 + $0x18] sm:$0xff] 0.0
        %267 = vst [vmem:[#allocation2 + $0x20] sm:$0xff] 0.0
        %268 = vst [vmem:[#allocation2 + $0x28] sm:$0xff] 0.0
        %269 = vst [vmem:[#allocation2 + $0x30] sm:$0xff] 0.0
        %270 = vst [vmem:[#allocation2 + $0x38] sm:$0xff] 0.0
        %271 = vst [vmem:[#allocation2 + $0x40] sm:$0xff] 0.0
        %272 = vst [vmem:[#allocation2 + $0x48] sm:$0xff] 0.0
        %273 = vst [vmem:[#allocation2 + $0x50] sm:$0xff] 0.0
        %274 = vst [vmem:[#allocation2 + $0x58] sm:$0xff] 0.0
        %275 = vst [vmem:[#allocation2 + $0x60] sm:$0xff] 0.0
        %276 = vst [vmem:[#allocation2 + $0x68] sm:$0xff] 0.0
        %277 = vst [vmem:[#allocation2 + $0x70] sm:$0xff] 0.0
        %278 = vst [vmem:[#allocation2 + $0x78] sm:$0xff] 0.0
        %279 = vst [vmem:[#allocation2 + $0x80] sm:$0xff] 0.0
        %280 = vst [vmem:[#allocation2 + $0x88] sm:$0xff] 0.0
        %281 = vst [vmem:[#allocation2 + $0x90] sm:$0xff] 0.0
        %282 = vst [vmem:[#allocation2 + $0x98] sm:$0xff] 0.0
        %283 = vst [vmem:[#allocation2 + $0xa0] sm:$0xff] 0.0
        %284 = vst [vmem:[#allocation2 + $0xa8] sm:$0xff] 0.0
        %285 = vst [vmem:[#allocation2 + $0xb0] sm:$0xff] 0.0
        %286 = vst [vmem:[#allocation2 + $0xb8] sm:$0xff] 0.0
        %287 = vst [vmem:[#allocation2 + $0xc0] sm:$0xff] 0.0
        %288 = vst [vmem:[#allocation2 + $0xc8] sm:$0xff] 0.0
        %289 = vst [vmem:[#allocation2 + $0xd0] sm:$0xff] 0.0
        %290 = vst [vmem:[#allocation2 + $0xd8] sm:$0xff] 0.0
        %291 = vst [vmem:[#allocation2 + $0xe0] sm:$0xff] 0.0
        %292 = vst [vmem:[#allocation2 + $0xe8] sm:$0xff] 0.0
        %293 = vst [vmem:[#allocation2 + $0xf0] sm:$0xff] 0.0
        %294 = vst [vmem:[#allocation2 + $0xf8] sm:$0xff] 0.0
      $region36: #{nconv2d_forward.1} parent=31 // pred_fallthru
        _
      %v295 = vld [vmem:[#allocation2] sm:$0xff]
      %v296 = vld [vmem:[#allocation2 + $0x8] sm:$0xff]
      %v297 = vld [vmem:[#allocation2 + $0x10] sm:$0xff]
      %v298 = vld [vmem:[#allocation2 + $0x18] sm:$0xff]
      %v299 = vld [vmem:[#allocation2 + $0x20] sm:$0xff]
      %v300 = vld [vmem:[#allocation2 + $0x28] sm:$0xff]
      %v301 = vld [vmem:[#allocation2 + $0x30] sm:$0xff]
      %v302 = vld [vmem:[#allocation2 + $0x38] sm:$0xff]
      %v303 = vld [vmem:[#allocation2 + $0x40] sm:$0xff]
      %v304 = vld [vmem:[#allocation2 + $0x48] sm:$0xff]
      %v305 = vld [vmem:[#allocation2 + $0x50] sm:$0xff]
      %v306 = vld [vmem:[#allocation2 + $0x58] sm:$0xff]
      %v307 = vld [vmem:[#allocation2 + $0x60] sm:$0xff]
      %v308 = vld [vmem:[#allocation2 + $0x68] sm:$0xff]
      %v309 = vld [vmem:[#allocation2 + $0x70] sm:$0xff]
      %v310 = vld [vmem:[#allocation2 + $0x78] sm:$0xff]
      %v311 = vld [vmem:[#allocation2 + $0x80] sm:$0xff]
      %v312 = vld [vmem:[#allocation2 + $0x88] sm:$0xff]
      %v313 = vld [vmem:[#allocation2 + $0x90] sm:$0xff]
      %v314 = vld [vmem:[#allocation2 + $0x98] sm:$0xff]
      %v315 = vld [vmem:[#allocation2 + $0xa0] sm:$0xff]
      %v316 = vld [vmem:[#allocation2 + $0xa8] sm:$0xff]
      %v317 = vld [vmem:[#allocation2 + $0xb0] sm:$0xff]
      %v318 = vld [vmem:[#allocation2 + $0xb8] sm:$0xff]
      %v319 = vld [vmem:[#allocation2 + $0xc0] sm:$0xff]
      %v320 = vld [vmem:[#allocation2 + $0xc8] sm:$0xff]
      %v321 = vld [vmem:[#allocation2 + $0xd0] sm:$0xff]
      %v322 = vld [vmem:[#allocation2 + $0xd8] sm:$0xff]
      %v323 = vld [vmem:[#allocation2 + $0xe0] sm:$0xff]
      %v324 = vld [vmem:[#allocation2 + $0xe8] sm:$0xff]
      %v325 = vld [vmem:[#allocation2 + $0xf0] sm:$0xff]
      %v326 = vld [vmem:[#allocation2 + $0xf8] sm:$0xff]
      %v327 = vld [vmem:[%s236] sm:$0xf]
      %v328 = vld [vmem:[%s236 + $0x4] sm:$0xf]
      %v329 = vld [vmem:[%s236 + $0x8] sm:$0xf]
      %v330 = vld [vmem:[%s236 + $0xc] sm:$0xf]
      %v331 = vld [vmem:[%s236 + $0x10] sm:$0xf]
      %v332 = vld [vmem:[%s236 + $0x14] sm:$0xf]
      %v333 = vld [vmem:[%s236 + $0x18] sm:$0xf]
      %v334 = vld [vmem:[%s236 + $0x1c] sm:$0xf]
      %v335 = vld [vmem:[%s236 + $0x20] sm:$0xf]
      %v336 = vld [vmem:[%s236 + $0x24] sm:$0xf]
      %v337 = vld [vmem:[%s236 + $0x28] sm:$0xf]
      %v338 = vld [vmem:[%s236 + $0x2c] sm:$0xf]
      %v339 = vld [vmem:[%s236 + $0x30] sm:$0xf]
      %v340 = vld [vmem:[%s236 + $0x34] sm:$0xf]
      %v341 = vld [vmem:[%s236 + $0x38] sm:$0xf]
      %v342 = vld [vmem:[%s236 + $0x3c] sm:$0xf]
      %v343 = vld [vmem:[%s236 + $0x40] sm:$0xf]
      %v344 = vld [vmem:[%s236 + $0x44] sm:$0xf]
      %v345 = vld [vmem:[%s236 + $0x48] sm:$0xf]
      %v346 = vld [vmem:[%s236 + $0x4c] sm:$0xf]
      %v347 = vld [vmem:[%s236 + $0x50] sm:$0xf]
      %v348 = vld [vmem:[%s236 + $0x54] sm:$0xf]
      %v349 = vld [vmem:[%s236 + $0x58] sm:$0xf]
      %v350 = vld [vmem:[%s236 + $0x5c] sm:$0xf]
      %v351 = vld [vmem:[%s236 + $0x60] sm:$0xf]
      %v352 = vld [vmem:[%s236 + $0x64] sm:$0xf]
      %v353 = vld [vmem:[%s236 + $0x68] sm:$0xf]
      %v354 = vld [vmem:[%s236 + $0x6c] sm:$0xf]
      %v355 = vld [vmem:[%s236 + $0x70] sm:$0xf]
      %v356 = vld [vmem:[%s236 + $0x74] sm:$0xf]
      %v357 = vld [vmem:[%s236 + $0x78] sm:$0xf]
      %v358 = vld [vmem:[%s236 + $0x7c] sm:$0xf]
      %v359 = vld [vmem:[%s245] sm:$0xf]
      %v360 = vld [vmem:[%s245 + $0x4] sm:$0xf]
      %v361 = vld [vmem:[%s245 + $0x8] sm:$0xf]
      %v362 = vld [vmem:[%s245 + $0xc] sm:$0xf]
      %v363 = vld [vmem:[%s245 + $0x10] sm:$0xf]
      %v364 = vld [vmem:[%s245 + $0x14] sm:$0xf]
      %v365 = vld [vmem:[%s245 + $0x18] sm:$0xf]
      %v366 = vld [vmem:[%s245 + $0x1c] sm:$0xf]
      %v367 = vld [vmem:[%s245 + $0x20] sm:$0xf]
      %v368 = vld [vmem:[%s245 + $0x24] sm:$0xf]
      %v369 = vld [vmem:[%s245 + $0x28] sm:$0xf]
      %v370 = vld [vmem:[%s245 + $0x2c] sm:$0xf]
      %v371 = vld [vmem:[%s245 + $0x30] sm:$0xf]
      %v372 = vld [vmem:[%s245 + $0x34] sm:$0xf]
      %v373 = vld [vmem:[%s245 + $0x38] sm:$0xf]
      %v374 = vld [vmem:[%s245 + $0x3c] sm:$0xf]
      %v407 = vunpack.c.l.b16 %v327
      %v408 = vunpack.c.l.b16 %v328
      %v409 = vunpack.c.l.b16 %v329
      %v410 = vunpack.c.l.b16 %v330
      %v411 = vunpack.c.l.b16 %v331
      %v412 = vunpack.c.l.b16 %v332
      %v413 = vunpack.c.l.b16 %v333
      %v414 = vunpack.c.l.b16 %v334
      %v415 = vunpack.c.l.b16 %v335
      %v416 = vunpack.c.l.b16 %v336
      %v417 = vunpack.c.l.b16 %v337
      %v418 = vunpack.c.l.b16 %v338
      %v419 = vunpack.c.l.b16 %v339
      %v420 = vunpack.c.l.b16 %v340
      %v421 = vunpack.c.l.b16 %v341
      %v422 = vunpack.c.l.b16 %v342
      %v423 = vunpack.c.l.b16 %v343
      %v424 = vunpack.c.l.b16 %v344
      %v425 = vunpack.c.l.b16 %v345
      %v426 = vunpack.c.l.b16 %v346
      %v427 = vunpack.c.l.b16 %v347
      %v428 = vunpack.c.l.b16 %v348
      %v429 = vunpack.c.l.b16 %v349
      %v430 = vunpack.c.l.b16 %v350
      %v431 = vunpack.c.l.b16 %v351
      %v432 = vunpack.c.l.b16 %v352
      %v433 = vunpack.c.l.b16 %v353
      %v434 = vunpack.c.l.b16 %v354
      %v435 = vunpack.c.l.b16 %v355
      %v436 = vunpack.c.l.b16 %v356
      %v437 = vunpack.c.l.b16 %v357
      %v438 = vunpack.c.l.b16 %v358
      %v439 = vpack.c.b16 %v408, %v407
      %v440 = vpack.c.b16 %v410, %v409
      %v441 = vpack.c.b16 %v412, %v411
      %v442 = vpack.c.b16 %v414, %v413
      %v443 = vpack.c.b16 %v416, %v415
      %v444 = vpack.c.b16 %v418, %v417
      %v445 = vpack.c.b16 %v420, %v419
      %v446 = vpack.c.b16 %v422, %v421
      %v447 = vpack.c.b16 %v424, %v423
      %v448 = vpack.c.b16 %v426, %v425
      %v449 = vpack.c.b16 %v428, %v427
      %v450 = vpack.c.b16 %v430, %v429
      %v451 = vpack.c.b16 %v432, %v431
      %v452 = vpack.c.b16 %v434, %v433
      %v453 = vpack.c.b16 %v436, %v435
      %v454 = vpack.c.b16 %v438, %v437
      %v487 = vunpack.c.l.b16 %v359
      %v488 = vunpack.c.l.b16 %v360
      %v489 = vunpack.c.l.b16 %v361
      %v490 = vunpack.c.l.b16 %v362
      %v491 = vunpack.c.l.b16 %v363
      %v492 = vunpack.c.l.b16 %v364
      %v493 = vunpack.c.l.b16 %v365
      %v494 = vunpack.c.l.b16 %v366
      %v495 = vunpack.c.l.b16 %v367
      %v496 = vunpack.c.l.b16 %v368
      %v497 = vunpack.c.l.b16 %v369
      %v498 = vunpack.c.l.b16 %v370
      %v499 = vunpack.c.l.b16 %v371
      %v500 = vunpack.c.l.b16 %v372
      %v501 = vunpack.c.l.b16 %v373
      %v502 = vunpack.c.l.b16 %v374
      %v503 = vpack.c.b16 %v488, %v487
      %v504 = vpack.c.b16 %v490, %v489
      %v505 = vpack.c.b16 %v492, %v491
      %v506 = vpack.c.b16 %v494, %v493
      %v507 = vpack.c.b16 %v496, %v495
      %v508 = vpack.c.b16 %v498, %v497
      %v509 = vpack.c.b16 %v500, %v499
      %v510 = vpack.c.b16 %v502, %v501
      %519 = vmatpush.bf16.msra.mxu0 %v510
      %520 = vmatpush.bf16.msra.mxu0 %v509
      %521 = vmatpush.bf16.msra.mxu0 %v508
      %522 = vmatpush.bf16.msra.mxu0 %v507
      %523 = vmatpush.bf16.msra.mxu0 %v506
      %524 = vmatpush.bf16.msra.mxu0 %v505
      %525 = vmatpush.bf16.msra.mxu0 %v504
      %526 = vmatpush.bf16.msra.mxu0 %v503
      %527 = vmatmul.bf16.gmra.mxu0 %v439
      %v528 = vpop.f32.mrf.mxu0
      %v529 = vadd.f32 0.0, %v528
      %v530 = vpop.f32.mrf.mxu0
      %v531 = vadd.f32 0.0, %v530
      %532 = vmatmul.bf16.gmra.mxu0 %v440
      %v533 = vpop.f32.mrf.mxu0
      %v534 = vadd.f32 0.0, %v533
      %v535 = vpop.f32.mrf.mxu0
      %v536 = vadd.f32 0.0, %v535
      %537 = vmatmul.bf16.gmra.mxu0 %v441
      %v538 = vpop.f32.mrf.mxu0
      %v539 = vadd.f32 0.0, %v538
      %v540 = vpop.f32.mrf.mxu0
      %v541 = vadd.f32 0.0, %v540
      %542 = vmatmul.bf16.gmra.mxu0 %v442
      %v543 = vpop.f32.mrf.mxu0
      %v544 = vadd.f32 0.0, %v543
      %v545 = vpop.f32.mrf.mxu0
      %v546 = vadd.f32 0.0, %v545
      %547 = vmatmul.bf16.gmra.mxu0 %v443
      %v548 = vpop.f32.mrf.mxu0
      %v549 = vadd.f32 0.0, %v548
      %v550 = vpop.f32.mrf.mxu0
      %v551 = vadd.f32 0.0, %v550
      %552 = vmatmul.bf16.gmra.mxu0 %v444
      %v553 = vpop.f32.mrf.mxu0
      %v554 = vadd.f32 0.0, %v553
      %v555 = vpop.f32.mrf.mxu0
      %v556 = vadd.f32 0.0, %v555
      %557 = vmatmul.bf16.gmra.mxu0 %v445
      %v558 = vpop.f32.mrf.mxu0
      %v559 = vadd.f32 0.0, %v558
      %v560 = vpop.f32.mrf.mxu0
      %v561 = vadd.f32 0.0, %v560
      %562 = vmatmul.bf16.gmra.mxu0 %v446
      %v563 = vpop.f32.mrf.mxu0
      %v564 = vadd.f32 0.0, %v563
      %v565 = vpop.f32.mrf.mxu0
      %v566 = vadd.f32 0.0, %v565
      %567 = vmatmul.bf16.gmra.mxu0 %v447
      %v568 = vpop.f32.mrf.mxu0
      %v569 = vadd.f32 0.0, %v568
      %v570 = vpop.f32.mrf.mxu0
      %v571 = vadd.f32 0.0, %v570
      %572 = vmatmul.bf16.gmra.mxu0 %v448
      %v573 = vpop.f32.mrf.mxu0
      %v574 = vadd.f32 0.0, %v573
      %v575 = vpop.f32.mrf.mxu0
      %v576 = vadd.f32 0.0, %v575
      %577 = vmatmul.bf16.gmra.mxu0 %v449
      %v578 = vpop.f32.mrf.mxu0
      %v579 = vadd.f32 0.0, %v578
      %v580 = vpop.f32.mrf.mxu0
      %v581 = vadd.f32 0.0, %v580
      %582 = vmatmul.bf16.gmra.mxu0 %v450
      %v583 = vpop.f32.mrf.mxu0
      %v584 = vadd.f32 0.0, %v583
      %v585 = vpop.f32.mrf.mxu0
      %v586 = vadd.f32 0.0, %v585
      %587 = vmatmul.bf16.gmra.mxu0 %v451
      %v588 = vpop.f32.mrf.mxu0
      %v589 = vadd.f32 0.0, %v588
      %v590 = vpop.f32.mrf.mxu0
      %v591 = vadd.f32 0.0, %v590
      %592 = vmatmul.bf16.gmra.mxu0 %v452
      %v593 = vpop.f32.mrf.mxu0
      %v594 = vadd.f32 0.0, %v593
      %v595 = vpop.f32.mrf.mxu0
      %v596 = vadd.f32 0.0, %v595
      %597 = vmatmul.bf16.gmra.mxu0 %v453
      %v598 = vpop.f32.mrf.mxu0
      %v599 = vadd.f32 0.0, %v598
      %v600 = vpop.f32.mrf.mxu0
      %v601 = vadd.f32 0.0, %v600
      %602 = vmatmul.bf16.gmra.mxu0 %v454
      %v603 = vpop.f32.mrf.mxu0
      %v604 = vadd.f32 0.0, %v603
      %v605 = vpop.f32.mrf.mxu0
      %v606 = vadd.f32 0.0, %v605
      %607 = vdwg.mxu0
      %v608 = vadd.f32 %v295, %v529
      %v609 = vadd.f32 %v296, %v531
      %v610 = vadd.f32 %v297, %v534
      %v611 = vadd.f32 %v298, %v536
      %v612 = vadd.f32 %v299, %v539
      %v613 = vadd.f32 %v300, %v541
      %v614 = vadd.f32 %v301, %v544
      %v615 = vadd.f32 %v302, %v546
      %v616 = vadd.f32 %v303, %v549
      %v617 = vadd.f32 %v304, %v551
      %v618 = vadd.f32 %v305, %v554
      %v619 = vadd.f32 %v306, %v556
      %v620 = vadd.f32 %v307, %v559
      %v621 = vadd.f32 %v308, %v561
      %v622 = vadd.f32 %v309, %v564
      %v623 = vadd.f32 %v310, %v566
      %v624 = vadd.f32 %v311, %v569
      %v625 = vadd.f32 %v312, %v571
      %v626 = vadd.f32 %v313, %v574
      %v627 = vadd.f32 %v314, %v576
      %v628 = vadd.f32 %v315, %v579
      %v629 = vadd.f32 %v316, %v581
      %v630 = vadd.f32 %v317, %v584
      %v631 = vadd.f32 %v318, %v586
      %v632 = vadd.f32 %v319, %v589
      %v633 = vadd.f32 %v320, %v591
      %v634 = vadd.f32 %v321, %v594
      %v635 = vadd.f32 %v322, %v596
      %v636 = vadd.f32 %v323, %v599
      %v637 = vadd.f32 %v324, %v601
      %v638 = vadd.f32 %v325, %v604
      %v639 = vadd.f32 %v326, %v606
      %640 = vst [vmem:[#allocation2] sm:$0xff] %v608
      %641 = vst [vmem:[#allocation2 + $0x8] sm:$0xff] %v609
      %642 = vst [vmem:[#allocation2 + $0x10] sm:$0xff] %v610
      %643 = vst [vmem:[#allocation2 + $0x18] sm:$0xff] %v611
      %644 = vst [vmem:[#allocation2 + $0x20] sm:$0xff] %v612
      %645 = vst [vmem:[#allocation2 + $0x28] sm:$0xff] %v613
      %646 = vst [vmem:[#allocation2 + $0x30] sm:$0xff] %v614
      %647 = vst [vmem:[#allocation2 + $0x38] sm:$0xff] %v615
      %648 = vst [vmem:[#allocation2 + $0x40] sm:$0xff] %v616
      %649 = vst [vmem:[#allocation2 + $0x48] sm:$0xff] %v617
      %650 = vst [vmem:[#allocation2 + $0x50] sm:$0xff] %v618
      %651 = vst [vmem:[#allocation2 + $0x58] sm:$0xff] %v619
      %652 = vst [vmem:[#allocation2 + $0x60] sm:$0xff] %v620
      %653 = vst [vmem:[#allocation2 + $0x68] sm:$0xff] %v621
      %654 = vst [vmem:[#allocation2 + $0x70] sm:$0xff] %v622
      %655 = vst [vmem:[#allocation2 + $0x78] sm:$0xff] %v623
      %656 = vst [vmem:[#allocation2 + $0x80] sm:$0xff] %v624
      %657 = vst [vmem:[#allocation2 + $0x88] sm:$0xff] %v625
      %658 = vst [vmem:[#allocation2 + $0x90] sm:$0xff] %v626
      %659 = vst [vmem:[#allocation2 + $0x98] sm:$0xff] %v627
      %660 = vst [vmem:[#allocation2 + $0xa0] sm:$0xff] %v628
      %661 = vst [vmem:[#allocation2 + $0xa8] sm:$0xff] %v629
      %662 = vst [vmem:[#allocation2 + $0xb0] sm:$0xff] %v630
      %663 = vst [vmem:[#allocation2 + $0xb8] sm:$0xff] %v631
      %664 = vst [vmem:[#allocation2 + $0xc0] sm:$0xff] %v632
      %665 = vst [vmem:[#allocation2 + $0xc8] sm:$0xff] %v633
      %666 = vst [vmem:[#allocation2 + $0xd0] sm:$0xff] %v634
      %667 = vst [vmem:[#allocation2 + $0xd8] sm:$0xff] %v635
      %668 = vst [vmem:[#allocation2 + $0xe0] sm:$0xff] %v636
      %669 = vst [vmem:[#allocation2 + $0xe8] sm:$0xff] %v637
      %670 = vst [vmem:[#allocation2 + $0xf0] sm:$0xff] %v638
      %671 = vst [vmem:[#allocation2 + $0xf8] sm:$0xff] %v639
      // Predicated region
      $region37: #{nconv2d_forward.1} parent=31 // pred_check
        %p672 = pneg %p259
      $region38: #{nconv2d_forward.1} parent=31 // pred_check_branch
        %674 = sbr.rel (%p672) target = $region40
      $region39: #{nconv2d_forward.1} parent=31 // pred_region
        %v675 = vld [vmem:[#allocation2] sm:$0xff]
        %v676 = vld [vmem:[#allocation2 + $0x8] sm:$0xff]
        %v677 = vld [vmem:[#allocation2 + $0x10] sm:$0xff]
        %v678 = vld [vmem:[#allocation2 + $0x18] sm:$0xff]
        %v679 = vld [vmem:[#allocation2 + $0x20] sm:$0xff]
        %v680 = vld [vmem:[#allocation2 + $0x28] sm:$0xff]
        %v681 = vld [vmem:[#allocation2 + $0x30] sm:$0xff]
        %v682 = vld [vmem:[#allocation2 + $0x38] sm:$0xff]
        %v683 = vld [vmem:[#allocation2 + $0x40] sm:$0xff]
        %v684 = vld [vmem:[#allocation2 + $0x48] sm:$0xff]
        %v685 = vld [vmem:[#allocation2 + $0x50] sm:$0xff]
        %v686 = vld [vmem:[#allocation2 + $0x58] sm:$0xff]
        %v687 = vld [vmem:[#allocation2 + $0x60] sm:$0xff]
        %v688 = vld [vmem:[#allocation2 + $0x68] sm:$0xff]
        %v689 = vld [vmem:[#allocation2 + $0x70] sm:$0xff]
        %v690 = vld [vmem:[#allocation2 + $0x78] sm:$0xff]
        %v691 = vld [vmem:[#allocation2 + $0x80] sm:$0xff]
        %v692 = vld [vmem:[#allocation2 + $0x88] sm:$0xff]
        %v693 = vld [vmem:[#allocation2 + $0x90] sm:$0xff]
        %v694 = vld [vmem:[#allocation2 + $0x98] sm:$0xff]
        %v695 = vld [vmem:[#allocation2 + $0xa0] sm:$0xff]
        %v696 = vld [vmem:[#allocation2 + $0xa8] sm:$0xff]
        %v697 = vld [vmem:[#allocation2 + $0xb0] sm:$0xff]
        %v698 = vld [vmem:[#allocation2 + $0xb8] sm:$0xff]
        %v699 = vld [vmem:[#allocation2 + $0xc0] sm:$0xff]
        %v700 = vld [vmem:[#allocation2 + $0xc8] sm:$0xff]
        %v701 = vld [vmem:[#allocation2 + $0xd0] sm:$0xff]
        %v702 = vld [vmem:[#allocation2 + $0xd8] sm:$0xff]
        %v703 = vld [vmem:[#allocation2 + $0xe0] sm:$0xff]
        %v704 = vld [vmem:[#allocation2 + $0xe8] sm:$0xff]
        %v705 = vld [vmem:[#allocation2 + $0xf0] sm:$0xff]
        %v706 = vld [vmem:[#allocation2 + $0xf8] sm:$0xff]
        %v707 = vld [vmem:[%s249] sm:$0x1]
        %v709 = vperm.slane %v707, 0
        %v711 = vadd.f32 %v675, %v709
        %v712 = vadd.f32 %v676, %v709
        %v713 = vadd.f32 %v677, %v709
        %v714 = vadd.f32 %v678, %v709
        %v715 = vadd.f32 %v679, %v709
        %v716 = vadd.f32 %v680, %v709
        %v717 = vadd.f32 %v681, %v709
        %v718 = vadd.f32 %v682, %v709
        %v719 = vadd.f32 %v683, %v709
        %v720 = vadd.f32 %v684, %v709
        %v721 = vadd.f32 %v685, %v709
        %v722 = vadd.f32 %v686, %v709
        %v723 = vadd.f32 %v687, %v709
        %v724 = vadd.f32 %v688, %v709
        %v725 = vadd.f32 %v689, %v709
        %v726 = vadd.f32 %v690, %v709
        %v727 = vadd.f32 %v691, %v709
        %v728 = vadd.f32 %v692, %v709
        %v729 = vadd.f32 %v693, %v709
        %v730 = vadd.f32 %v694, %v709
        %v731 = vadd.f32 %v695, %v709
        %v732 = vadd.f32 %v696, %v709
        %v733 = vadd.f32 %v697, %v709
        %v734 = vadd.f32 %v698, %v709
        %v735 = vadd.f32 %v699, %v709
        %v736 = vadd.f32 %v700, %v709
        %v737 = vadd.f32 %v701, %v709
        %v738 = vadd.f32 %v702, %v709
        %v739 = vadd.f32 %v703, %v709
        %v740 = vadd.f32 %v704, %v709
        %v741 = vadd.f32 %v705, %v709
        %v742 = vadd.f32 %v706, %v709
        %743 = vst [vmem:[%s257] sm:$0xff] %v711
        %744 = vst [vmem:[%s257 + $0x8] sm:$0xff] %v712
        %745 = vst [vmem:[%s257 + $0x10] sm:$0xff] %v713
        %746 = vst [vmem:[%s257 + $0x18] sm:$0xff] %v714
        %747 = vst [vmem:[%s257 + $0x20] sm:$0xff] %v715
        %748 = vst [vmem:[%s257 + $0x28] sm:$0xff] %v716
        %749 = vst [vmem:[%s257 + $0x30] sm:$0xff] %v717
        %750 = vst [vmem:[%s257 + $0x38] sm:$0xff] %v718
        %751 = vst [vmem:[%s257 + $0x40] sm:$0xff] %v719
        %752 = vst [vmem:[%s257 + $0x48] sm:$0xff] %v720
        %753 = vst [vmem:[%s257 + $0x50] sm:$0xff] %v721
        %754 = vst [vmem:[%s257 + $0x58] sm:$0xff] %v722
        %755 = vst [vmem:[%s257 + $0x60] sm:$0xff] %v723
        %756 = vst [vmem:[%s257 + $0x68] sm:$0xff] %v724
        %757 = vst [vmem:[%s257 + $0x70] sm:$0xff] %v725
        %758 = vst [vmem:[%s257 + $0x78] sm:$0xff] %v726
        %759 = vst [vmem:[%s257 + $0x80] sm:$0xff] %v727
        %760 = vst [vmem:[%s257 + $0x88] sm:$0xff] %v728
        %761 = vst [vmem:[%s257 + $0x90] sm:$0xff] %v729
        %762 = vst [vmem:[%s257 + $0x98] sm:$0xff] %v730
        %763 = vst [vmem:[%s257 + $0xa0] sm:$0xff] %v731
        %764 = vst [vmem:[%s257 + $0xa8] sm:$0xff] %v732
        %765 = vst [vmem:[%s257 + $0xb0] sm:$0xff] %v733
        %766 = vst [vmem:[%s257 + $0xb8] sm:$0xff] %v734
        %767 = vst [vmem:[%s257 + $0xc0] sm:$0xff] %v735
        %768 = vst [vmem:[%s257 + $0xc8] sm:$0xff] %v736
        %769 = vst [vmem:[%s257 + $0xd0] sm:$0xff] %v737
        %770 = vst [vmem:[%s257 + $0xd8] sm:$0xff] %v738
        %771 = vst [vmem:[%s257 + $0xe0] sm:$0xff] %v739
        %772 = vst [vmem:[%s257 + $0xe8] sm:$0xff] %v740
        %773 = vst [vmem:[%s257 + $0xf0] sm:$0xff] %v741
        %774 = vst [vmem:[%s257 + $0xf8] sm:$0xff] %v742
      $region40: #{nconv2d_forward.1} parent=31 // pred_fallthru
        _
      %s775 = smul.u32 32, %s19
      %p776 = scmp.lt.s32.totalorder %s775, 63
      %s777 = scalar_select %p776, %s775, 63
      %p778 = scmp.lt.s32.totalorder %s20, 0
      %s779 = scalar_select %p778, %s20, 0
      %s780 = sadd.s32 %s779, %s777
      %s781 = smul.addr %s780, 8
      %s782 = scalar_lea.vmem %s3, %s781
      // Predicated region
      $region41: #{nconv2d_forward.1} parent=31 // pred_check
        %p783 = pneg %p135
      $region42: #{nconv2d_forward.1} parent=31 // pred_check_branch
        %785 = sbr.rel (%p783) target = $region44
      $region43: #{nconv2d_forward.1} parent=31 // pred_region
        %s786 = smul.u32 32, %s19
      $region44: #{nconv2d_forward.1} parent=31 // pred_fallthru
        _
    $region32: #{nconv2d_forward.1} parent=5 // pred_fallthru
      _
    %p787 = scmp.le.s32.totalorder 2, %s9
    // Predicated region
    $region45: #{nconv2d_forward.1} parent=5 // pred_check
      %p788 = pneg %p787
    $region46: #{nconv2d_forward.1} parent=5 // pred_check_branch
      %790 = sbr.rel (%p788) target = $region48
    $region47: #{nconv2d_forward.1} parent=5 // pred_region
      %s791 = ssub.s32 %s9, 2
      // Predicated region
      $region49: #{nconv2d_forward.1} parent=47 // pred_check
        %p792 = pneg %p141
      $region50: #{nconv2d_forward.1} parent=47 // pred_check_branch
        %794 = sbr.rel (%p792) target = $region52
      $region51: #{nconv2d_forward.1} parent=47 // pred_region
        %s795 = smul.u32 32, %s22
        %p796 = scmp.lt.s32.totalorder %s795, 63
        %s797 = scalar_select %p796, %s795, 63
        %p798 = scmp.lt.s32.totalorder %s23, 0
        %s799 = scalar_select %p798, %s23, 0
        %s800 = sadd.s32 %s799, %s797
        %s801 = smul.addr %s800, 8
        %s802 = scalar_lea.vmem %s3, %s801
      $region52: #{nconv2d_forward.1} parent=47 // pred_fallthru
        _
    $region48: #{nconv2d_forward.1} parent=5 // pred_fallthru
      _
  $region6: #{nconv2d_forward.1} parent=0 // loop_footer
    %s13 = sadd.s32 1, %s9
  $region7: #{nconv2d_forward.1} parent=0 // loop_footer_branch
    %8 = sbr.rel target = $region3
  $region8: #{nconv2d_forward.1} parent=0 // loop_exit
    _

</llo_original>
